<compile_context>
chip_gen: v5e
topology: v5e:2x2
jax: 0.10.0
libtpu: 0.0.40
codegen_flags: <defaults>
</compile_context>

<pallas_src>
import functools

import jax
import jax.numpy as jnp
from jax.experimental import pallas as pl
from jax.experimental.pallas import tpu as pltpu


EPS = 1e-6


def _elu_plus_one(x):
    # elu(x) + 1 == x + 1 (x > 0) else exp(x).  exp(min(x, 0)) keeps the
    # discarded branch finite even for undefined rows in padded boundary tiles.
    x = x.astype(jnp.float32)
    return jnp.where(x > 0, x + 1.0, jnp.exp(jnp.minimum(x, 0.0)))


def _kv_state_kernel(k_ref, v_ref, kv_ref, ksum_ref, *, seq_len, chunk, mask_tail):
    # k_ref:    (1, Hg, tkv, Dk)   v_ref:   (1, Hg, tkv, Dv)
    # kv_ref:   (1, Hg, Dk, Dv)    ksum_ref:(1, Hg, 1, Dk)     (f32 accumulators)
    c = pl.program_id(2)

    @pl.when(c == 0)
    def _():
        kv_ref[...] = jnp.zeros_like(kv_ref)
        ksum_ref[...] = jnp.zeros_like(ksum_ref)

    k_p = _elu_plus_one(k_ref[0])                                # (Hg, tkv, Dk) f32
    v_c = v_ref[0].astype(jnp.float32)                           # (Hg, tkv, Dv) f32

    if mask_tail:
        # Zero out rows past the true sequence length in the final chunk so
        # they do not contaminate the accumulated state.
        row = jax.lax.broadcasted_iota(jnp.int32, (1, chunk, 1), 1)
        valid = (c * chunk + row) < seq_len
        k_p = jnp.where(valid, k_p, 0.0)
        v_c = jnp.where(valid, v_c, 0.0)

    # k'^T @ v per head: contract the sequence axis on the MXU with bf16
    # operands / f32 accumulation.
    kv_ref[0] += jnp.einsum(
        "hsd,hse->hde",
        k_p.astype(jnp.bfloat16),
        v_c.astype(jnp.bfloat16),
        preferred_element_type=jnp.float32)                      # (Hg, Dk, Dv)

    # ksum stays f32 (denominator path).
    ksum_ref[0] += jnp.sum(k_p, axis=1, keepdims=True)           # (Hg, 1, Dk)


def _apply_kernel(q_ref, kv_ref, ksum_ref, o_ref):
    # q_ref: (1, H, tq, Dk)  kv_ref: (1, H, Dk, Dv)  ksum_ref: (1, H, 1, Dk)
    # o_ref: (1, H, tq, Dv)
    q_p = _elu_plus_one(q_ref[0])                                # (H, tq, Dk) f32

    # q' @ (k'^T v) per head on the MXU (bf16 operands, f32 accumulation).
    num = jnp.einsum(
        "hsd,hde->hse",
        q_p.astype(jnp.bfloat16),
        kv_ref[0].astype(jnp.bfloat16),
        preferred_element_type=jnp.float32)                      # (H, tq, Dv)

    # Denominator on the VPU/XLU: broadcast multiply + lane reduce, f32.
    denom = jnp.sum(q_p * ksum_ref[0], axis=-1, keepdims=True) + EPS

    out = num * pl.reciprocal(denom, approx=True)                # (H, tq, Dv)
    o_ref[0] = out.astype(o_ref.dtype)


def _vmem_limit_bytes():
    """Generation-aware VMEM limit with headroom for compiler scratch."""
    cap = 64 * 2**20
    try:
        info = pltpu.get_tpu_info()
        cap = int(getattr(info, "vmem_capacity_bytes", cap))
    except Exception:
        pass
    # Leave >=16 MiB headroom (or half on small parts); allow ~100 MiB on
    # 128 MiB parts, ~48 MiB on v7x.
    return int(min(max(cap // 2, cap - 16 * 2**20), 100 * 2**20))


def _choose_seq_tile(seq_len, bytes_per_row, budget_bytes, max_tile=1024):
    """Largest sequence tile (multiple of 8, or the full axis) fitting budget."""
    fit_rows = max(8, int(budget_bytes // max(1, bytes_per_row)))
    if seq_len <= min(fit_rows, max_tile):
        return seq_len
    tile = min(fit_rows, max_tile, seq_len)
    if tile >= 512:
        tile = (tile // 512) * 512
    else:
        tile = (tile // 8) * 8
    return max(8, tile)


def linear_attention(q, k, v, mask=None):
    """q, k, v: (B, H, S, D) -> (B, H, S, Dv). `mask` is accepted and ignored
    (the reference forward never uses it)."""
    del mask
    B, H, S, Dk = q.shape
    Dv = v.shape[-1]
    itemsize = jnp.dtype(q.dtype).itemsize

    vmem_limit = _vmem_limit_bytes()
    tile_budget = vmem_limit // 3   # leave room for state blocks + compiler scratch

    # ---------- pass 1: accumulate KV state over S chunks ----------
    # Split heads into 2 groups when possible so the two "parallel" axes give
    # the v7x megacore work even at B == 1.
    G = 2 if (H >= 2 and H % 2 == 0) else 1
    Hg = H // G

    kv_row_bytes = 2 * Hg * (Dk + Dv) * itemsize     # double-buffered k + v per seq row
    tkv = _choose_seq_tile(S, kv_row_bytes, tile_budget)
    C = pl.cdiv(S, tkv)

    kv_state, k_sum = pl.pallas_call(
        functools.partial(_kv_state_kernel, seq_len=S, chunk=tkv,
                          mask_tail=(S % tkv != 0)),
        out_shape=(jax.ShapeDtypeStruct((B, H, Dk, Dv), jnp.float32),
                   jax.ShapeDtypeStruct((B, H, 1, Dk), jnp.float32)),
        grid_spec=pltpu.PrefetchScalarGridSpec(
            num_scalar_prefetch=0,
            grid=(B, G, C),
            in_specs=[
                pl.BlockSpec((1, Hg, tkv, Dk), lambda b, g, c: (b, g, c, 0)),
                pl.BlockSpec((1, Hg, tkv, Dv), lambda b, g, c: (b, g, c, 0)),
            ],
            out_specs=(
                # Constant block index across the chunk axis -> accumulator
                # stays resident in VMEM; written back once per (b, g).
                pl.BlockSpec((1, Hg, Dk, Dv), lambda b, g, c: (b, g, 0, 0)),
                pl.BlockSpec((1, Hg, 1, Dk), lambda b, g, c: (b, g, 0, 0)),
            ),
        ),
        compiler_params=pltpu.CompilerParams(
            dimension_semantics=("parallel", "parallel", "arbitrary"),
            vmem_limit_bytes=vmem_limit,
        ),
        cost_estimate=pl.CostEstimate(
            flops=2 * B * H * S * Dk * Dv + 2 * B * H * S * Dk,
            transcendentals=B * H * S * Dk,
            bytes_accessed=itemsize * B * H * S * (Dk + Dv)
            + 4 * B * H * Dk * (Dv + 1),
        ),
    )(k, v)

    # ---------- pass 2: apply the state to q tiles ----------
    q_row_bytes = 2 * H * (Dk + Dv) * itemsize       # double-buffered q + out per seq row
    tq = _choose_seq_tile(S, q_row_bytes, tile_budget)
    T = pl.cdiv(S, tq)

    out = pl.pallas_call(
        _apply_kernel,
        out_shape=jax.ShapeDtypeStruct((B, H, S, Dv), q.dtype),
        grid_spec=pltpu.PrefetchScalarGridSpec(
            num_scalar_prefetch=0,
            grid=(B, T),
            in_specs=[
                pl.BlockSpec((1, H, tq, Dk), lambda b, t: (b, 0, t, 0)),
                # KV state: constant block index per b -> one small DMA per b.
                pl.BlockSpec((1, H, Dk, Dv), lambda b, t: (b, 0, 0, 0)),
                pl.BlockSpec((1, H, 1, Dk), lambda b, t: (b, 0, 0, 0)),
            ],
            out_specs=pl.BlockSpec((1, H, tq, Dv), lambda b, t: (b, 0, t, 0)),
        ),
        compiler_params=pltpu.CompilerParams(
            # No cross-step state in this pass, so both axes are parallel
            # (good megacore balance on v7x even for B == 1).
            dimension_semantics=("parallel", "parallel"),
            vmem_limit_bytes=vmem_limit,
        ),
        cost_estimate=pl.CostEstimate(
            flops=2 * B * H * S * Dk * Dv + 3 * B * H * S * Dk,
            transcendentals=B * H * S * Dk + B * H * S,
            bytes_accessed=itemsize * B * H * S * (Dk + Dv)
            + 4 * B * H * Dk * (Dv + 1),
        ),
    )(q, kv_state, k_sum)

    return out


def linear_attention_ref(q, k, v):
    q_prime = jax.nn.elu(q) + 1.0
    k_prime = jax.nn.elu(k) + 1.0
    kv = jnp.einsum("bhsd,bhse->bhde", k_prime, v)
    num = jnp.einsum("bhsd,bhde->bhse", q_prime, kv)
    k_sum = jnp.sum(k_prime, axis=-2, keepdims=True)             # (B, H, 1, Dk)
    denom = jnp.sum(q_prime * k_sum, axis=-1, keepdims=True) + EPS
    return num / denom


if __name__ == "__main__":
    key = jax.random.PRNGKey(0)
    kq, kk, kvk = jax.random.split(key, 3)

    B, H, S, Dk, Dv = 2, 4, 16, 32, 32
    q = jax.random.normal(kq, (B, H, S, Dk), dtype=jnp.float32)
    k = jax.random.normal(kk, (B, H, S, Dk), dtype=jnp.float32)
    v = jax.random.normal(kvk, (B, H, S, Dv), dtype=jnp.float32)

    fn = jax.jit(linear_attention)
    out = jax.block_until_ready(fn(q, k, v))
    ref = linear_attention_ref(q, k, v)

    assert out.shape == (B, H, S, Dv)
    # Tolerance accounts for bf16 matmul operands (f32 accumulation) and the
    # EUP approximate reciprocal used for the normalization.
    assert jnp.allclose(out, ref, rtol=2e-2, atol=2e-3), "mismatch vs reference"

    print("KERNEL_OK")
</pallas_src>

<mosaic_0001>
module attributes {stable_mosaic.version = 11 : i64} {
  func.func @_apply_kernel(%arg0: i32, %arg1: i32, %arg2: memref<1x4x16x32xf32, #tpu.memory_space<vmem>>, %arg3: memref<1x4x32x32xf32, #tpu.memory_space<vmem>>, %arg4: memref<1x4x1x32xf32, #tpu.memory_space<vmem>>, %arg5: memref<1x4x16x32xf32, #tpu.memory_space<vmem>>) attributes {dimension_semantics = [#tpu.dimension_semantics<parallel>, #tpu.dimension_semantics<parallel>], iteration_bounds = array<i64: 2, 1>, scalar_prefetch = 0 : i64, scratch_operands = 0 : i64, tpu.core_type = #tpu.core_type<tc>, window_params = [{transform_indices = @transform_0, window_bounds = array<i64: 1, 4, 16, 32>}, {transform_indices = @transform_1, window_bounds = array<i64: 1, 4, 32, 32>}, {transform_indices = @transform_2, window_bounds = array<i64: 1, 4, 1, 32>}, {transform_indices = @transform_3, window_bounds = array<i64: 1, 4, 16, 32>}]} {
    %c0 = arith.constant 0 : index
    %c0_0 = arith.constant 0 : index
    %c0_1 = arith.constant 0 : index
    %c0_2 = arith.constant 0 : index
    %0 = vector.load %arg2[%c0, %c0_0, %c0_1, %c0_2] : memref<1x4x16x32xf32, #tpu.memory_space<vmem>>, vector<1x4x16x32xf32>
    %1 = vector.shape_cast %0 : vector<1x4x16x32xf32> to vector<4x16x32xf32>
    %cst = arith.constant 0.000000e+00 : f32
    %2 = vector.broadcast %cst : f32 to vector<4x16x32xf32>
    %3 = arith.cmpf ogt, %1, %2 : vector<4x16x32xf32>
    %cst_3 = arith.constant 1.000000e+00 : f32
    %4 = vector.broadcast %cst_3 : f32 to vector<4x16x32xf32>
    %5 = arith.addf %1, %4 : vector<4x16x32xf32>
    %cst_4 = arith.constant 0.000000e+00 : f32
    %6 = vector.broadcast %cst_4 : f32 to vector<4x16x32xf32>
    %7 = arith.minimumf %1, %6 : vector<4x16x32xf32>
    %8 = math.exp %7 : vector<4x16x32xf32>
    %9 = arith.select %3, %5, %8 : vector<4x16x32xi1>, vector<4x16x32xf32>
    %10 = arith.truncf %9 : vector<4x16x32xf32> to vector<4x16x32xbf16>
    %c0_5 = arith.constant 0 : index
    %c0_6 = arith.constant 0 : index
    %c0_7 = arith.constant 0 : index
    %c0_8 = arith.constant 0 : index
    %11 = vector.load %arg3[%c0_5, %c0_6, %c0_7, %c0_8] : memref<1x4x32x32xf32, #tpu.memory_space<vmem>>, vector<1x4x32x32xf32>
    %12 = vector.shape_cast %11 : vector<1x4x32x32xf32> to vector<4x32x32xf32>
    %13 = arith.truncf %12 : vector<4x32x32xf32> to vector<4x32x32xbf16>
    "tpu.trace_start"() <{level = 10 : i32, message = "hsd,hde->hse"}> : () -> ()
    %cst_9 = arith.constant dense<0.000000e+00> : vector<4x16x32xf32>
    %14 = tpu.matmul %10, %13, %cst_9 {dimension_numbers = #tpu.dot_dimension_numbers<[2], [1], [1], [2], [0, 0, 0, 1, 1, 2], [0], [0]>} : vector<4x16x32xbf16>, vector<4x32x32xbf16>, vector<4x16x32xf32> -> vector<4x16x32xf32>
    "tpu.trace_stop"() : () -> ()
    %c0_10 = arith.constant 0 : index
    %c0_11 = arith.constant 0 : index
    %c0_12 = arith.constant 0 : index
    %c0_13 = arith.constant 0 : index
    %15 = vector.load %arg4[%c0_10, %c0_11, %c0_12, %c0_13] : memref<1x4x1x32xf32, #tpu.memory_space<vmem>>, vector<1x4x1x32xf32>
    %16 = vector.shape_cast %15 : vector<1x4x1x32xf32> to vector<4x1x32xf32>
    %17 = vector.broadcast %16 : vector<4x1x32xf32> to vector<4x16x32xf32>
    %18 = arith.mulf %9, %17 : vector<4x16x32xf32>
    %cst_14 = arith.constant dense<0.000000e+00> : vector<4x16xf32>
    %19 = vector.multi_reduction <add>, %18, %cst_14 [2] : vector<4x16x32xf32> to vector<4x16xf32>
    %20 = vector.shape_cast %19 : vector<4x16xf32> to vector<4x16x1xf32>
    %cst_15 = arith.constant 9.99999997E-7 : f32
    %21 = vector.broadcast %cst_15 : f32 to vector<4x16x1xf32>
    %22 = arith.addf %20, %21 : vector<4x16x1xf32>
    %23 = tpu.reciprocal %22 {approx = true} : vector<4x16x1xf32> -> vector<4x16x1xf32>
    %24 = vector.broadcast %23 : vector<4x16x1xf32> to vector<4x16x32xf32>
    %25 = arith.mulf %14, %24 : vector<4x16x32xf32>
    %c0_16 = arith.constant 0 : index
    %c0_17 = arith.constant 0 : index
    %c0_18 = arith.constant 0 : index
    %c0_19 = arith.constant 0 : index
    %26 = vector.load %arg5[%c0_16, %c0_17, %c0_18, %c0_19] : memref<1x4x16x32xf32, #tpu.memory_space<vmem>>, vector<1x4x16x32xf32>
    %27 = vector.shape_cast %26 : vector<1x4x16x32xf32> to vector<4x16x32xf32>
    %28 = vector.shape_cast %25 : vector<4x16x32xf32> to vector<1x4x16x32xf32>
    tpu.vector_store %arg5[%c0_16, %c0_17, %c0_18, %c0_19], %28 {strides = array<i32>} : memref<1x4x16x32xf32, #tpu.memory_space<vmem>>, vector<1x4x16x32xf32>,
    return
  }
  func.func @transform_0(%arg0: i32, %arg1: i32) -> (i32, i32, i32, i32) {
    %c0_i32 = arith.constant 0 : i32
    %c0_i32_0 = arith.constant 0 : i32
    %c0_i32_1 = arith.constant 0 : i32
    return %arg0, %c0_i32, %arg1, %c0_i32_0 : i32, i32, i32, i32
  }
  func.func @transform_1(%arg0: i32, %arg1: i32) -> (i32, i32, i32, i32) {
    %c0_i32 = arith.constant 0 : i32
    %c0_i32_0 = arith.constant 0 : i32
    %c0_i32_1 = arith.constant 0 : i32
    %c0_i32_2 = arith.constant 0 : i32
    return %arg0, %c0_i32, %c0_i32_0, %c0_i32_1 : i32, i32, i32, i32
  }
  func.func @transform_2(%arg0: i32, %arg1: i32) -> (i32, i32, i32, i32) {
    %c0_i32 = arith.constant 0 : i32
    %c0_i32_0 = arith.constant 0 : i32
    %c0_i32_1 = arith.constant 0 : i32
    %c0_i32_2 = arith.constant 0 : i32
    return %arg0, %c0_i32, %c0_i32_0, %c0_i32_1 : i32, i32, i32, i32
  }
  func.func @transform_3(%arg0: i32, %arg1: i32) -> (i32, i32, i32, i32) {
    %c0_i32 = arith.constant 0 : i32
    %c0_i32_0 = arith.constant 0 : i32
    %c0_i32_1 = arith.constant 0 : i32
    return %arg0, %c0_i32, %arg1, %c0_i32_0 : i32, i32, i32, i32
  }
}

module attributes {stable_mosaic.version = 11 : i64} {
  func.func @_kv_state_kernel(%arg0: i32, %arg1: i32, %arg2: i32, %arg3: memref<1x2x16x32xf32, #tpu.memory_space<vmem>>, %arg4: memref<1x2x16x32xf32, #tpu.memory_space<vmem>>, %arg5: memref<1x2x32x32xf32, #tpu.memory_space<vmem>>, %arg6: memref<1x2x1x32xf32, #tpu.memory_space<vmem>>) attributes {dimension_semantics = [#tpu.dimension_semantics<parallel>, #tpu.dimension_semantics<parallel>, #tpu.dimension_semantics<arbitrary>], iteration_bounds = array<i64: 2, 2, 1>, scalar_prefetch = 0 : i64, scratch_operands = 0 : i64, tpu.core_type = #tpu.core_type<tc>, window_params = [{transform_indices = @transform_0, window_bounds = array<i64: 1, 2, 16, 32>}, {transform_indices = @transform_1, window_bounds = array<i64: 1, 2, 16, 32>}, {transform_indices = @transform_2, window_bounds = array<i64: 1, 2, 32, 32>}, {transform_indices = @transform_3, window_bounds = array<i64: 1, 2, 1, 32>}]} {
    %c0_i32 = arith.constant 0 : i32
    %0 = arith.cmpi eq, %arg2, %c0_i32 : i32
    %1 = arith.extui %0 : i1 to i32
    %c0_i32_0 = arith.constant 0 : i32
    %2 = arith.cmpi ne, %1, %c0_i32_0 : i32
    scf.if %2 {
      %cst_28 = arith.constant 0.000000e+00 : f32
      %32 = vector.broadcast %cst_28 : f32 to vector<1x2x32x32xf32>
      %c0_29 = arith.constant 0 : index
      %c0_30 = arith.constant 0 : index
      %c0_31 = arith.constant 0 : index
      %c0_32 = arith.constant 0 : index
      %33 = vector.load %arg5[%c0_29, %c0_30, %c0_31, %c0_32] : memref<1x2x32x32xf32, #tpu.memory_space<vmem>>, vector<1x2x32x32xf32>
      tpu.vector_store %arg5[%c0_29, %c0_30, %c0_31, %c0_32], %32 {strides = array<i32>} : memref<1x2x32x32xf32, #tpu.memory_space<vmem>>, vector<1x2x32x32xf32>,
      %cst_33 = arith.constant 0.000000e+00 : f32
      %34 = vector.broadcast %cst_33 : f32 to vector<1x2x1x32xf32>
      %c0_34 = arith.constant 0 : index
      %c0_35 = arith.constant 0 : index
      %c0_36 = arith.constant 0 : index
      %c0_37 = arith.constant 0 : index
      %35 = vector.load %arg6[%c0_34, %c0_35, %c0_36, %c0_37] : memref<1x2x1x32xf32, #tpu.memory_space<vmem>>, vector<1x2x1x32xf32>
      tpu.vector_store %arg6[%c0_34, %c0_35, %c0_36, %c0_37], %34 {strides = array<i32>} : memref<1x2x1x32xf32, #tpu.memory_space<vmem>>, vector<1x2x1x32xf32>,
    } else {
    }
    %c0 = arith.constant 0 : index
    %c0_1 = arith.constant 0 : index
    %c0_2 = arith.constant 0 : index
    %c0_3 = arith.constant 0 : index
    %3 = vector.load %arg3[%c0, %c0_1, %c0_2, %c0_3] : memref<1x2x16x32xf32, #tpu.memory_space<vmem>>, vector<1x2x16x32xf32>
    %4 = vector.shape_cast %3 : vector<1x2x16x32xf32> to vector<2x16x32xf32>
    %cst = arith.constant 0.000000e+00 : f32
    %5 = vector.broadcast %cst : f32 to vector<2x16x32xf32>
    %6 = arith.cmpf ogt, %4, %5 : vector<2x16x32xf32>
    %cst_4 = arith.constant 1.000000e+00 : f32
    %7 = vector.broadcast %cst_4 : f32 to vector<2x16x32xf32>
    %8 = arith.addf %4, %7 : vector<2x16x32xf32>
    %cst_5 = arith.constant 0.000000e+00 : f32
    %9 = vector.broadcast %cst_5 : f32 to vector<2x16x32xf32>
    %10 = arith.minimumf %4, %9 : vector<2x16x32xf32>
    %11 = math.exp %10 : vector<2x16x32xf32>
    %12 = arith.select %6, %8, %11 : vector<2x16x32xi1>, vector<2x16x32xf32>
    %c0_6 = arith.constant 0 : index
    %c0_7 = arith.constant 0 : index
    %c0_8 = arith.constant 0 : index
    %c0_9 = arith.constant 0 : index
    %13 = vector.load %arg4[%c0_6, %c0_7, %c0_8, %c0_9] : memref<1x2x16x32xf32, #tpu.memory_space<vmem>>, vector<1x2x16x32xf32>
    %14 = vector.shape_cast %13 : vector<1x2x16x32xf32> to vector<2x16x32xf32>
    %c0_10 = arith.constant 0 : index
    %c0_11 = arith.constant 0 : index
    %c0_12 = arith.constant 0 : index
    %c0_13 = arith.constant 0 : index
    %15 = vector.load %arg5[%c0_10, %c0_11, %c0_12, %c0_13] : memref<1x2x32x32xf32, #tpu.memory_space<vmem>>, vector<1x2x32x32xf32>
    %16 = vector.shape_cast %15 : vector<1x2x32x32xf32> to vector<2x32x32xf32>
    %17 = arith.truncf %12 : vector<2x16x32xf32> to vector<2x16x32xbf16>
    %18 = arith.truncf %14 : vector<2x16x32xf32> to vector<2x16x32xbf16>
    "tpu.trace_start"() <{level = 10 : i32, message = "hsd,hse->hde"}> : () -> ()
    %cst_14 = arith.constant dense<0.000000e+00> : vector<2x32x32xf32>
    %19 = tpu.matmul %17, %18, %cst_14 {dimension_numbers = #tpu.dot_dimension_numbers<[1], [1], [2], [2], [0, 0, 0, 2, 1, 2], [0], [0]>} : vector<2x16x32xbf16>, vector<2x16x32xbf16>, vector<2x32x32xf32> -> vector<2x32x32xf32>
    "tpu.trace_stop"() : () -> ()
    %20 = arith.addf %16, %19 : vector<2x32x32xf32>
    %c0_15 = arith.constant 0 : index
    %c0_16 = arith.constant 0 : index
    %c0_17 = arith.constant 0 : index
    %c0_18 = arith.constant 0 : index
    %21 = vector.load %arg5[%c0_15, %c0_16, %c0_17, %c0_18] : memref<1x2x32x32xf32, #tpu.memory_space<vmem>>, vector<1x2x32x32xf32>
    %22 = vector.shape_cast %21 : vector<1x2x32x32xf32> to vector<2x32x32xf32>
    %23 = vector.shape_cast %20 : vector<2x32x32xf32> to vector<1x2x32x32xf32>
    tpu.vector_store %arg5[%c0_15, %c0_16, %c0_17, %c0_18], %23 {strides = array<i32>} : memref<1x2x32x32xf32, #tpu.memory_space<vmem>>, vector<1x2x32x32xf32>,
    %c0_19 = arith.constant 0 : index
    %c0_20 = arith.constant 0 : index
    %c0_21 = arith.constant 0 : index
    %c0_22 = arith.constant 0 : index
    %24 = vector.load %arg6[%c0_19, %c0_20, %c0_21, %c0_22] : memref<1x2x1x32xf32, #tpu.memory_space<vmem>>, vector<1x2x1x32xf32>
    %25 = vector.shape_cast %24 : vector<1x2x1x32xf32> to vector<2x1x32xf32>
    %cst_23 = arith.constant dense<0.000000e+00> : vector<2x32xf32>
    %26 = vector.multi_reduction <add>, %12, %cst_23 [1] : vector<2x16x32xf32> to vector<2x32xf32>
    %27 = vector.shape_cast %26 : vector<2x32xf32> to vector<2x1x32xf32>
    %28 = arith.addf %25, %27 : vector<2x1x32xf32>
    %c0_24 = arith.constant 0 : index
    %c0_25 = arith.constant 0 : index
    %c0_26 = arith.constant 0 : index
    %c0_27 = arith.constant 0 : index
    %29 = vector.load %arg6[%c0_24, %c0_25, %c0_26, %c0_27] : memref<1x2x1x32xf32, #tpu.memory_space<vmem>>, vector<1x2x1x32xf32>
    %30 = vector.shape_cast %29 : vector<1x2x1x32xf32> to vector<2x1x32xf32>
    %31 = vector.shape_cast %28 : vector<2x1x32xf32> to vector<1x2x1x32xf32>
    tpu.vector_store %arg6[%c0_24, %c0_25, %c0_26, %c0_27], %31 {strides = array<i32>} : memref<1x2x1x32xf32, #tpu.memory_space<vmem>>, vector<1x2x1x32xf32>,
    return
  }
  func.func @transform_0(%arg0: i32, %arg1: i32, %arg2: i32) -> (i32, i32, i32, i32) {
    %c0_i32 = arith.constant 0 : i32
    %c0_i32_0 = arith.constant 0 : i32
    return %arg0, %arg1, %arg2, %c0_i32 : i32, i32, i32, i32
  }
  func.func @transform_1(%arg0: i32, %arg1: i32, %arg2: i32) -> (i32, i32, i32, i32) {
    %c0_i32 = arith.constant 0 : i32
    %c0_i32_0 = arith.constant 0 : i32
    return %arg0, %arg1, %arg2, %c0_i32 : i32, i32, i32, i32
  }
  func.func @transform_2(%arg0: i32, %arg1: i32, %arg2: i32) -> (i32, i32, i32, i32) {
    %c0_i32 = arith.constant 0 : i32
    %c0_i32_0 = arith.constant 0 : i32
    %c0_i32_1 = arith.constant 0 : i32
    return %arg0, %arg1, %c0_i32, %c0_i32_0 : i32, i32, i32, i32
  }
  func.func @transform_3(%arg0: i32, %arg1: i32, %arg2: i32) -> (i32, i32, i32, i32) {
    %c0_i32 = arith.constant 0 : i32
    %c0_i32_0 = arith.constant 0 : i32
    %c0_i32_1 = arith.constant 0 : i32
    return %arg0, %arg1, %c0_i32, %c0_i32_0 : i32, i32, i32, i32
  }
}

</mosaic_0001>

<llo_original>
// kernel: linear_attention.3
$region0: #{linear_attention.3}
  #allocation0 [shape = 'u32[]', space=smem, size = 0x4, offset = 0x4, fixed_abs, tag = 'smem constant byte address 0x4 - core index']
  #allocation1 [shape = 'u32[72,128]{1,0:T(1,128)}', space=vmem, size = 0x9000, scoped, tag = 'internal scratch']
  %s0 = inlined_call_operand.vmem [shape: f32[2,4,16,32], index: 0, kind: input, shape index: {}]
  %s1 = inlined_call_operand.vmem [shape: f32[2,4,32,32], index: 1, kind: input, shape index: {}]
  %s2 = inlined_call_operand.vmem [shape: f32[2,4,1,32], index: 2, kind: input, shape index: {}]
  %s3 = inlined_call_operand.hbm [shape: f32[2,4,16,32], index: 3, kind: output, shape index: {}]
  %s4 = sld [smem:[#allocation0]]
  $region45: #{linear_attention.3} parent=0
    _
  %s6 = ssub.s32 1, %s4
  %s7 = scalar_select 0, %s6, %s4
  $region1: #{linear_attention.3} parent=0
    #allocation2 [shape = 'u8[65536]{0}', space=vmem, size = 0x10000, scoped, tag = 'output window, operand 0']
    #allocation3 [shape = 's32[2]{0}', space=sflag, size = 0x8, scoped, tag = 'scoped memory for linear_attention.3']
    %8 = vsyncpa [#allocation3], 0
    %s9 = scalar_lea.sflag [#allocation3], 1
    %10 = vsyncpa %s9, 0
    loop: start=0, step=1, limit=4
    $region2: #{linear_attention.3} parent=1 // loop_pre_header
      _
    $region3: #{linear_attention.3} parent=1 // loop_header
      %s12 = sphi 0, %s16
      %p13 = scmp.ge.s32.totalorder %s12, 4
      %s19 = sphi 0, %s31
      %s20 = sphi 0, %s27
      %s21 = sphi 0, %s19
      %s22 = sphi 0, %s20
      %s23 = sphi 0, %s21
      %s24 = sphi 0, %s22
      %s36 = sphi 0, %s38
      %s39 = sphi 0, %s36
      %s40 = sphi 0, %s39
      %s56 = sphi 0, %s40
      %s62 = sphi 0, %s64
      %s65 = sphi 0, %s62
      %s66 = sphi 0, %s65
      %s82 = sphi 0, %s66
      %s88 = sphi 0, %s90
      %s91 = sphi 0, %s88
      %s92 = sphi 0, %s91
      %s108 = sphi 0, %s92
      %s116 = sphi 0, %s118
      %s119 = sphi 0, %s116
      %s120 = sphi 0, %s119
      %s136 = sphi 0, %s120
    $region4: #{linear_attention.3} parent=1 // loop_header_branch
      %15 = sbr.rel (%p13) target = $region8
    $region5: #{linear_attention.3} parent=1 // loop_body
      %s17 = ssub.s32 %s12, 1
      %s18 = ssub.s32 %s12, 2
      %s25 = sadd.s32 1, %s20
      %p26 = scmp.ge.s32.totalorder %s25, 1
      %s27 = scalar_select %p26, 0, %s25
      %s28 = sadd.s32 1, %s19
      %s29 = scalar_select %p26, %s28, %s19
      %p30 = scmp.ge.s32.totalorder %s29, 2
      %s31 = scalar_select %p30, 0, %s29
      %s32 = ssub.s32 %s19, %s31
      %s33 = ssub.s32 %s20, %s27
      %s34 = sor.u32 %s32, %s33
      %p35 = scmp.eq.s32.totalorder %s34, 0
      %s37 = sadd.s32 %s36, 1
      %s38 = scalar_select %p35, %s36, %s37
      %p41 = pneg %p35
      %p42 = scmp.eq.s32.totalorder %s12, 1
      %p43 = por %p41, %p42
      %p44 = scmp.ne.s32.totalorder %s36, %s39
      %p45 = scmp.eq.s32.totalorder %s12, 0
      %p46 = por %p44, %p45
      %p47 = scmp.ne.s32.totalorder %s36, %s39
      %p48 = scmp.eq.s32.totalorder %s17, 1
      %p49 = por %p47, %p48
      %p50 = scmp.ne.s32.totalorder %s39, %s40
      %p51 = scmp.eq.s32.totalorder %s17, 0
      %p52 = por %p50, %p51
      %p53 = scmp.ne.s32.totalorder %s39, %s40
      %p54 = scmp.eq.s32.totalorder %s18, 1
      %p55 = por %p53, %p54
      %p57 = scmp.ne.s32.totalorder %s40, %s56
      %p58 = scmp.eq.s32.totalorder %s18, 0
      %p59 = por %p57, %p58
      %s60 = ssub.s32 %s19, %s31
      %p61 = scmp.eq.s32.totalorder %s60, 0
      %s63 = sadd.s32 %s62, 1
      %s64 = scalar_select %p61, %s62, %s63
      %p67 = pneg %p61
      %p68 = scmp.eq.s32.totalorder %s12, 1
      %p69 = por %p67, %p68
      %p70 = scmp.ne.s32.totalorder %s62, %s65
      %p71 = scmp.eq.s32.totalorder %s12, 0
      %p72 = por %p70, %p71
      %p73 = scmp.ne.s32.totalorder %s62, %s65
      %p74 = scmp.eq.s32.totalorder %s17, 1
      %p75 = por %p73, %p74
      %p76 = scmp.ne.s32.totalorder %s65, %s66
      %p77 = scmp.eq.s32.totalorder %s17, 0
      %p78 = por %p76, %p77
      %p79 = scmp.ne.s32.totalorder %s65, %s66
      %p80 = scmp.eq.s32.totalorder %s18, 1
      %p81 = por %p79, %p80
      %p83 = scmp.ne.s32.totalorder %s66, %s82
      %p84 = scmp.eq.s32.totalorder %s18, 0
      %p85 = por %p83, %p84
      %s86 = ssub.s32 %s19, %s31
      %p87 = scmp.eq.s32.totalorder %s86, 0
      %s89 = sadd.s32 %s88, 1
      %s90 = scalar_select %p87, %s88, %s89
      %p93 = pneg %p87
      %p94 = scmp.eq.s32.totalorder %s12, 1
      %p95 = por %p93, %p94
      %p96 = scmp.ne.s32.totalorder %s88, %s91
      %p97 = scmp.eq.s32.totalorder %s12, 0
      %p98 = por %p96, %p97
      %p99 = scmp.ne.s32.totalorder %s88, %s91
      %p100 = scmp.eq.s32.totalorder %s17, 1
      %p101 = por %p99, %p100
      %p102 = scmp.ne.s32.totalorder %s91, %s92
      %p103 = scmp.eq.s32.totalorder %s17, 0
      %p104 = por %p102, %p103
      %p105 = scmp.ne.s32.totalorder %s91, %s92
      %p106 = scmp.eq.s32.totalorder %s18, 1
      %p107 = por %p105, %p106
      %p109 = scmp.ne.s32.totalorder %s92, %s108
      %p110 = scmp.eq.s32.totalorder %s18, 0
      %p111 = por %p109, %p110
      %s112 = ssub.s32 %s19, %s31
      %s113 = ssub.s32 %s20, %s27
      %s114 = sor.u32 %s112, %s113
      %p115 = scmp.eq.s32.totalorder %s114, 0
      %s117 = sadd.s32 %s116, 1
      %s118 = scalar_select %p115, %s116, %s117
      %p121 = pneg %p115
      %p122 = scmp.eq.s32.totalorder %s12, 1
      %p123 = por %p121, %p122
      %p124 = scmp.ne.s32.totalorder %s116, %s119
      %p125 = scmp.eq.s32.totalorder %s12, 0
      %p126 = por %p124, %p125
      %p127 = scmp.ne.s32.totalorder %s116, %s119
      %p128 = scmp.eq.s32.totalorder %s17, 1
      %p129 = por %p127, %p128
      %p130 = scmp.ne.s32.totalorder %s119, %s120
      %p131 = scmp.eq.s32.totalorder %s17, 0
      %p132 = por %p130, %p131
      %p133 = scmp.ne.s32.totalorder %s119, %s120
      %p134 = scmp.eq.s32.totalorder %s18, 1
      %p135 = por %p133, %p134
      %p137 = scmp.ne.s32.totalorder %s120, %s136
      %p138 = scmp.eq.s32.totalorder %s18, 0
      %p139 = por %p137, %p138
      %p140 = scmp.le.s32.totalorder 1, %s12
      %p141 = scmp.lt.s32.totalorder %s12, 3
      %p142 = pnand %p140, %p141
      %p143 = pneg %p142
      // Predicated region
      $region9: #{linear_attention.3} parent=5 // pred_check
        _
      $region10: #{linear_attention.3} parent=5 // pred_check_branch
        %145 = sbr.rel (%p142) target = $region12
      $region11: #{linear_attention.3} parent=5 // pred_region
        %s146 = ssub.s32 %s12, 1
      $region12: #{linear_attention.3} parent=5 // pred_fallthru
        _
      %p147 = scmp.lt.s32.totalorder %s12, 2
      // Predicated region
      $region13: #{linear_attention.3} parent=5 // pred_check
        %p148 = pneg %p147
      $region14: #{linear_attention.3} parent=5 // pred_check_branch
        %150 = sbr.rel (%p148) target = $region16
      $region15: #{linear_attention.3} parent=5 // pred_region
        // Predicated region
        $region17: #{linear_attention.3} parent=15 // pred_check
          %p151 = pneg %p46
        $region18: #{linear_attention.3} parent=15 // pred_check_branch
          %153 = sbr.rel (%p151) target = $region20
        $region19: #{linear_attention.3} parent=15 // pred_region
          %s154 = smul.u32 2, %s20
          %p155 = scmp.lt.s32.totalorder %s19, 1
          %s156 = scalar_select %p155, %s19, 1
          %p157 = scmp.lt.s32.totalorder %s154, 1
          %s158 = scalar_select %p157, %s154, 1
          %s159 = smul.addr %s156, 8
          %s160 = sadd.s32 %s158, %s159
          %s161 = smul.addr %s160, 8
          %s162 = scalar_lea.vmem %s0, %s161
          %s163 = smul.u32 2, %s20
        $region20: #{linear_attention.3} parent=15 // pred_fallthru
          _
        // Predicated region
        $region21: #{linear_attention.3} parent=15 // pred_check
          %p164 = pneg %p72
        $region22: #{linear_attention.3} parent=15 // pred_check_branch
          %166 = sbr.rel (%p164) target = $region24
        $region23: #{linear_attention.3} parent=15 // pred_region
          %p167 = scmp.lt.s32.totalorder %s19, 1
          %s168 = scalar_select %p167, %s19, 1
          %s169 = smul.addr %s168, 16
          %s170 = smul.addr %s169, 8
          %s171 = scalar_lea.vmem %s1, %s170
        $region24: #{linear_attention.3} parent=15 // pred_fallthru
          _
        // Predicated region
        $region25: #{linear_attention.3} parent=15 // pred_check
          %p172 = pneg %p98
        $region26: #{linear_attention.3} parent=15 // pred_check_branch
          %174 = sbr.rel (%p172) target = $region28
        $region27: #{linear_attention.3} parent=15 // pred_region
          %p175 = scmp.lt.s32.totalorder %s19, 1
          %s176 = scalar_select %p175, %s19, 1
          %s177 = smul.addr %s176, 4
          %s178 = scalar_lea.vmem %s2, %s177
        $region28: #{linear_attention.3} parent=15 // pred_fallthru
          _
      $region16: #{linear_attention.3} parent=5 // pred_fallthru
        _
      %p179 = scmp.le.s32.totalorder 1, %s12
      %p180 = scmp.lt.s32.totalorder %s12, 3
      %p181 = pnand %p179, %p180
      %p182 = pneg %p181
      // Predicated region
      $region29: #{linear_attention.3} parent=5 // pred_check
        _
      $region30: #{linear_attention.3} parent=5 // pred_check_branch
        %184 = sbr.rel (%p181) target = $region32
      $region31: #{linear_attention.3} parent=5 // pred_region
        %s185 = ssub.s32 %s12, 1
        %s186 = smul.u32 2, %s22
        %p187 = scmp.lt.s32.totalorder %s21, 1
        %s188 = scalar_select %p187, %s21, 1
        %p189 = scmp.lt.s32.totalorder %s186, 1
        %s190 = scalar_select %p189, %s186, 1
        %s191 = smul.addr %s188, 8
        %s192 = sadd.s32 %s190, %s191
        %s193 = smul.addr %s192, 8
        %s194 = scalar_lea.vmem %s0, %s193
        %p195 = pneg %p52
        %p196 = pneg %p49
        %p197 = scmp.lt.s32.totalorder %s21, 1
        %s198 = scalar_select %p197, %s21, 1
        %s199 = smul.addr %s198, 16
        %s200 = smul.addr %s199, 8
        %s201 = scalar_lea.vmem %s1, %s200
        %p202 = pneg %p78
        %p203 = pneg %p75
        %p204 = scmp.lt.s32.totalorder %s21, 1
        %s205 = scalar_select %p204, %s21, 1
        %s206 = smul.addr %s205, 4
        %s207 = scalar_lea.vmem %s2, %s206
        %p208 = pneg %p104
        %p209 = pneg %p101
        %p210 = pneg %p132
        %p211 = pneg %p129
        %s212 = sand.u32 %s119, 1
        %s213 = scalar_lea.sflag [#allocation3], %s212
        %s214 = sand.u32 %s119, 1
        %s215 = smul.addr %s214, 64
        %s216 = scalar_lea.vmem [#allocation2], %s215
        %s217 = smul.u32 2, %s22
        %p218 = scmp.lt.s32.totalorder %s21, 1
        %s219 = scalar_select %p218, %s21, 1
        %p220 = scmp.lt.s32.totalorder %s217, 1
        %s221 = scalar_select %p220, %s217, 1
        %s222 = smul.addr %s219, 8
        %s223 = sadd.s32 %s221, %s222
        %s224 = smul.addr %s223, 8
        %s225 = scalar_lea.vmem %s0, %s224
        %s226 = smul.u32 2, %s22
        %p227 = scmp.lt.s32.totalorder %s21, 1
        %s228 = scalar_select %p227, %s21, 1
        %s229 = smul.addr %s228, 16
        %s230 = smul.addr %s229, 8
        %s231 = scalar_lea.vmem %s1, %s230
        %p232 = scmp.lt.s32.totalorder %s21, 1
        %s233 = scalar_select %p232, %s21, 1
        %s234 = smul.addr %s233, 4
        %s235 = scalar_lea.vmem %s2, %s234
        %s236 = smul.u32 2, %s22
        %v238 = vld [vmem:[%s225] sm:$0xff]
        %v239 = vld [vmem:[%s225 + $0x8] sm:$0xff]
        %v240 = vld [vmem:[%s225 + $0x10] sm:$0xff]
        %v241 = vld [vmem:[%s225 + $0x18] sm:$0xff]
        %v242 = vld [vmem:[%s225 + $0x20] sm:$0xff]
        %v243 = vld [vmem:[%s225 + $0x28] sm:$0xff]
        %v244 = vld [vmem:[%s225 + $0x30] sm:$0xff]
        %v245 = vld [vmem:[%s225 + $0x38] sm:$0xff]
        %vm246 = vcmp.gt.f32.partialorder %v238, 0.0
        %vm247 = vcmp.gt.f32.partialorder %v239, 0.0
        %vm248 = vcmp.gt.f32.partialorder %v240, 0.0
        %vm249 = vcmp.gt.f32.partialorder %v241, 0.0
        %vm250 = vcmp.gt.f32.partialorder %v242, 0.0
        %vm251 = vcmp.gt.f32.partialorder %v243, 0.0
        %vm252 = vcmp.gt.f32.partialorder %v244, 0.0
        %vm253 = vcmp.gt.f32.partialorder %v245, 0.0
        %v254 = vadd.f32 %v238, 1.0
        %v255 = vadd.f32 %v239, 1.0
        %v256 = vadd.f32 %v240, 1.0
        %v257 = vadd.f32 %v241, 1.0
        %v258 = vadd.f32 %v242, 1.0
        %v259 = vadd.f32 %v243, 1.0
        %v260 = vadd.f32 %v244, 1.0
        %v261 = vadd.f32 %v245, 1.0
        %v262 = vmin.f32 %v238, 0.0
        %v263 = vmin.f32 %v239, 0.0
        %v264 = vmin.f32 %v240, 0.0
        %v265 = vmin.f32 %v241, 0.0
        %v266 = vmin.f32 %v242, 0.0
        %v267 = vmin.f32 %v243, 0.0
        %v268 = vmin.f32 %v244, 0.0
        %v269 = vmin.f32 %v245, 0.0
        %v270 = vmul.f32 %v262, 1.442695
        %v271 = vpow.pop %v270
        %v272 = vmul.f32 %v263, 1.442695
        %v273 = vpow.pop %v272
        %v274 = vmul.f32 %v264, 1.442695
        %v275 = vpow.pop %v274
        %v276 = vmul.f32 %v265, 1.442695
        %v277 = vpow.pop %v276
        %v278 = vmul.f32 %v266, 1.442695
        %v279 = vpow.pop %v278
        %v280 = vmul.f32 %v267, 1.442695
        %v281 = vpow.pop %v280
        %v282 = vmul.f32 %v268, 1.442695
        %v283 = vpow.pop %v282
        %v284 = vmul.f32 %v269, 1.442695
        %v285 = vpow.pop %v284
        %v286 = vsel %vm246, %v254, %v271
        %v287 = vsel %vm247, %v255, %v273
        %v288 = vsel %vm248, %v256, %v275
        %v289 = vsel %vm249, %v257, %v277
        %v290 = vsel %vm250, %v258, %v279
        %v291 = vsel %vm251, %v259, %v281
        %v292 = vsel %vm252, %v260, %v283
        %v293 = vsel %vm253, %v261, %v285
        %v294 = vpack.c.bf16 %v286, %v286
        %v295 = vpack.c.bf16 %v287, %v287
        %v296 = vpack.c.bf16 %v288, %v288
        %v297 = vpack.c.bf16 %v289, %v289
        %v298 = vpack.c.bf16 %v290, %v290
        %v299 = vpack.c.bf16 %v291, %v291
        %v300 = vpack.c.bf16 %v292, %v292
        %v301 = vpack.c.bf16 %v293, %v293
        %v302 = vld [vmem:[%s231] sm:$0xff]
        %v303 = vld [vmem:[%s231 + $0x8] sm:$0xff]
        %v304 = vld [vmem:[%s231 + $0x10] sm:$0xff]
        %v305 = vld [vmem:[%s231 + $0x18] sm:$0xff]
        %v306 = vld [vmem:[%s231 + $0x20] sm:$0xff]
        %v307 = vld [vmem:[%s231 + $0x28] sm:$0xff]
        %v308 = vld [vmem:[%s231 + $0x30] sm:$0xff]
        %v309 = vld [vmem:[%s231 + $0x38] sm:$0xff]
        %v310 = vld [vmem:[%s231 + $0x40] sm:$0xff]
        %v311 = vld [vmem:[%s231 + $0x48] sm:$0xff]
        %v312 = vld [vmem:[%s231 + $0x50] sm:$0xff]
        %v313 = vld [vmem:[%s231 + $0x58] sm:$0xff]
        %v314 = vld [vmem:[%s231 + $0x60] sm:$0xff]
        %v315 = vld [vmem:[%s231 + $0x68] sm:$0xff]
        %v316 = vld [vmem:[%s231 + $0x70] sm:$0xff]
        %v317 = vld [vmem:[%s231 + $0x78] sm:$0xff]
        %v318 = vpack.c.bf16 %v302, %v302
        %v319 = vpack.c.bf16 %v303, %v303
        %v320 = vpack.c.bf16 %v304, %v304
        %v321 = vpack.c.bf16 %v305, %v305
        %v322 = vpack.c.bf16 %v306, %v306
        %v323 = vpack.c.bf16 %v307, %v307
        %v324 = vpack.c.bf16 %v308, %v308
        %v325 = vpack.c.bf16 %v309, %v309
        %v326 = vpack.c.bf16 %v310, %v310
        %v327 = vpack.c.bf16 %v311, %v311
        %v328 = vpack.c.bf16 %v312, %v312
        %v329 = vpack.c.bf16 %v313, %v313
        %v330 = vpack.c.bf16 %v314, %v314
        %v331 = vpack.c.bf16 %v315, %v315
        %v332 = vpack.c.bf16 %v316, %v316
        %v333 = vpack.c.bf16 %v317, %v317
        %v336 = vunpack.c.l.b16 %v294
        %v337 = vunpack.c.l.b16 %v295
        %v338 = vpack.c.b16 %v337, %v336
        %v343 = vunpack.c.l.b16 %v318
        %v344 = vunpack.c.l.b16 %v319
        %v345 = vunpack.c.l.b16 %v320
        %v346 = vunpack.c.l.b16 %v321
        %v347 = vpack.c.b16 %v344, %v343
        %v348 = vpack.c.b16 %v346, %v345
        %vm351 = vcmask 261120
        %v353 = vsel %vm351, %v338, 0
        %355 = vmatpush.bf16.msra.mxu0 0
        %356 = vmatpush.bf16.msra.mxu0 0
        %357 = vmatpush.bf16.msra.mxu0 0
        %358 = vmatpush.bf16.msra.mxu0 0
        %359 = vmatpush.bf16.msra.mxu0 0
        %360 = vmatpush.bf16.msra.mxu0 0
        %361 = vmatpush.bf16.msra.mxu0 %v348
        %362 = vmatpush.bf16.msra.mxu0 %v347
        %363 = vmatmul.bf16.gmra.mxu0 %v353
        %v364 = vpop.f32.mrf.mxu0
        %v365 = vadd.f32 0.0, %v364
        %v366 = vpop.f32.mrf.mxu0
        %v367 = vadd.f32 0.0, %v366
        %368 = vdwg.mxu0
        %v371 = vunpack.c.l.b16 %v296
        %v372 = vunpack.c.l.b16 %v297
        %v373 = vpack.c.b16 %v372, %v371
        %v378 = vunpack.c.l.b16 %v322
        %v379 = vunpack.c.l.b16 %v323
        %v380 = vunpack.c.l.b16 %v324
        %v381 = vunpack.c.l.b16 %v325
        %v382 = vpack.c.b16 %v379, %v378
        %v383 = vpack.c.b16 %v381, %v380
        %v387 = vsel %vm351, %v373, 0
        %389 = vmatpush.bf16.msra.mxu0 0
        %390 = vmatpush.bf16.msra.mxu0 0
        %391 = vmatpush.bf16.msra.mxu0 0
        %392 = vmatpush.bf16.msra.mxu0 0
        %393 = vmatpush.bf16.msra.mxu0 0
        %394 = vmatpush.bf16.msra.mxu0 0
        %395 = vmatpush.bf16.msra.mxu0 %v383
        %396 = vmatpush.bf16.msra.mxu0 %v382
        %397 = vmatmul.bf16.gmra.mxu0 %v387
        %v398 = vpop.f32.mrf.mxu0
        %v399 = vadd.f32 0.0, %v398
        %v400 = vpop.f32.mrf.mxu0
        %v401 = vadd.f32 0.0, %v400
        %402 = vdwg.mxu0
        %v405 = vunpack.c.l.b16 %v298
        %v406 = vunpack.c.l.b16 %v299
        %v407 = vpack.c.b16 %v406, %v405
        %v412 = vunpack.c.l.b16 %v326
        %v413 = vunpack.c.l.b16 %v327
        %v414 = vunpack.c.l.b16 %v328
        %v415 = vunpack.c.l.b16 %v329
        %v416 = vpack.c.b16 %v413, %v412
        %v417 = vpack.c.b16 %v415, %v414
        %v421 = vsel %vm351, %v407, 0
        %423 = vmatpush.bf16.msra.mxu0 0
        %424 = vmatpush.bf16.msra.mxu0 0
        %425 = vmatpush.bf16.msra.mxu0 0
        %426 = vmatpush.bf16.msra.mxu0 0
        %427 = vmatpush.bf16.msra.mxu0 0
        %428 = vmatpush.bf16.msra.mxu0 0
        %429 = vmatpush.bf16.msra.mxu0 %v417
        %430 = vmatpush.bf16.msra.mxu0 %v416
        %431 = vmatmul.bf16.gmra.mxu0 %v421
        %v432 = vpop.f32.mrf.mxu0
        %v433 = vadd.f32 0.0, %v432
        %v434 = vpop.f32.mrf.mxu0
        %v435 = vadd.f32 0.0, %v434
        %436 = vdwg.mxu0
        %v439 = vunpack.c.l.b16 %v300
        %v440 = vunpack.c.l.b16 %v301
        %v441 = vpack.c.b16 %v440, %v439
        %v446 = vunpack.c.l.b16 %v330
        %v447 = vunpack.c.l.b16 %v331
        %v448 = vunpack.c.l.b16 %v332
        %v449 = vunpack.c.l.b16 %v333
        %v450 = vpack.c.b16 %v447, %v446
        %v451 = vpack.c.b16 %v449, %v448
        %v455 = vsel %vm351, %v441, 0
        %457 = vmatpush.bf16.msra.mxu0 0
        %458 = vmatpush.bf16.msra.mxu0 0
        %459 = vmatpush.bf16.msra.mxu0 0
        %460 = vmatpush.bf16.msra.mxu0 0
        %461 = vmatpush.bf16.msra.mxu0 0
        %462 = vmatpush.bf16.msra.mxu0 0
        %463 = vmatpush.bf16.msra.mxu0 %v451
        %464 = vmatpush.bf16.msra.mxu0 %v450
        %465 = vmatmul.bf16.gmra.mxu0 %v455
        %v466 = vpop.f32.mrf.mxu0
        %v467 = vadd.f32 0.0, %v466
        %v468 = vpop.f32.mrf.mxu0
        %v469 = vadd.f32 0.0, %v468
        %470 = vdwg.mxu0
        %v471 = vld [vmem:[%s235] sm:$0x1]
        %v472 = vld [vmem:[%s235 + $0x1] sm:$0x1]
        %v473 = vld [vmem:[%s235 + $0x2] sm:$0x1]
        %v474 = vld [vmem:[%s235 + $0x3] sm:$0x1]
        %v479 = vperm.slane %v471, 0
        %v480 = vperm.slane %v472, 0
        %v481 = vperm.slane %v473, 0
        %v482 = vperm.slane %v474, 0
        %v487 = vmul.f32 %v286, %v479
        %v488 = vmul.f32 %v287, %v479
        %v489 = vmul.f32 %v288, %v480
        %v490 = vmul.f32 %v289, %v480
        %v491 = vmul.f32 %v290, %v481
        %v492 = vmul.f32 %v291, %v481
        %v493 = vmul.f32 %v292, %v482
        %v494 = vmul.f32 %v293, %v482
        %v495 = vsel %vm351, %v487, 0.0
        %496 = vadd.xlane.f32.xlu0 %v495
        %v497 = vpop.xlane.xlu0 %496
        %v498 = vsel %vm351, %v488, 0.0
        %499 = vadd.xlane.f32.xlu0 %v498
        %v500 = vpop.xlane.xlu0 %499
        %v501 = vsel %vm351, %v489, 0.0
        %502 = vadd.xlane.f32.xlu0 %v501
        %v503 = vpop.xlane.xlu0 %502
        %v504 = vsel %vm351, %v490, 0.0
        %505 = vadd.xlane.f32.xlu0 %v504
        %v506 = vpop.xlane.xlu0 %505
        %v507 = vsel %vm351, %v491, 0.0
        %508 = vadd.xlane.f32.xlu0 %v507
        %v509 = vpop.xlane.xlu0 %508
        %v510 = vsel %vm351, %v492, 0.0
        %511 = vadd.xlane.f32.xlu0 %v510
        %v512 = vpop.xlane.xlu0 %511
        %v513 = vsel %vm351, %v493, 0.0
        %514 = vadd.xlane.f32.xlu0 %v513
        %v515 = vpop.xlane.xlu0 %514
        %v516 = vsel %vm351, %v494, 0.0
        %517 = vadd.xlane.f32.xlu0 %v516
        %v518 = vpop.xlane.xlu0 %517
        %v519 = vadd.f32 %v497, 1e-06
        %v520 = vadd.f32 %v500, 1e-06
        %v521 = vadd.f32 %v503, 1e-06
        %v522 = vadd.f32 %v506, 1e-06
        %v523 = vadd.f32 %v509, 1e-06
        %v524 = vadd.f32 %v512, 1e-06
        %v525 = vadd.f32 %v515, 1e-06
        %v526 = vadd.f32 %v518, 1e-06
        %v527 = vrcp.pop %v519
        %v528 = vrcp.pop %v520
        %v529 = vrcp.pop %v521
        %v530 = vrcp.pop %v522
        %v531 = vrcp.pop %v523
        %v532 = vrcp.pop %v524
        %v533 = vrcp.pop %v525
        %v534 = vrcp.pop %v526
        %v535 = vmul.f32 %v365, %v527
        %v536 = vmul.f32 %v367, %v528
        %v537 = vmul.f32 %v399, %v529
        %v538 = vmul.f32 %v401, %v530
        %v539 = vmul.f32 %v433, %v531
        %v540 = vmul.f32 %v435, %v532
        %v541 = vmul.f32 %v467, %v533
        %v542 = vmul.f32 %v469, %v534
        %543 = vst.msk [vmem:[%s216] sm:$0xff] %vm351, %v535
        %544 = vst.msk [vmem:[%s216 + $0x8] sm:$0xff] %vm351, %v536
        %545 = vst.msk [vmem:[%s216 + $0x10] sm:$0xff] %vm351, %v537
        %546 = vst.msk [vmem:[%s216 + $0x18] sm:$0xff] %vm351, %v538
        %547 = vst.msk [vmem:[%s216 + $0x20] sm:$0xff] %vm351, %v539
        %548 = vst.msk [vmem:[%s216 + $0x28] sm:$0xff] %vm351, %v540
        %549 = vst.msk [vmem:[%s216 + $0x30] sm:$0xff] %vm351, %v541
        %550 = vst.msk [vmem:[%s216 + $0x38] sm:$0xff] %vm351, %v542
        %s551 = sand.u32 %s119, 1
        %s552 = scalar_lea.sflag [#allocation3], %s551
        %s553 = sand.u32 %s119, 1
        %s554 = smul.addr %s553, 64
        %s555 = scalar_lea.vmem [#allocation2], %s554
        // Predicated region
        $region33: #{linear_attention.3} parent=31 // pred_check
          %p556 = pneg %p129
        $region34: #{linear_attention.3} parent=31 // pred_check_branch
          %558 = sbr.rel (%p556) target = $region36
        $region35: #{linear_attention.3} parent=31 // pred_region
          %s559 = smul.u32 2, %s22
          %561 = vsyncadd %s552, 0
          %s562 = smul.addr %s21, 8
          %s563 = sadd.s32 %s559, %s562
          %s564 = smul.addr %s563, 8
          %s565 = scalar_lea.hbm %s3, %s564
          %s566 = sshll.u32 %s555, 4
          %s567 = int_to_ptr.vmem [resolvable:$true] %s566
          %s568 = sshll.u32 %s565, 4
          %s569 = int_to_ptr.hbm [resolvable:$true] %s568
          %574 = dma.vmem_to_hbm [thread:$0]  %s567, 1024, %s569, %s552, 128, 128, 8
        $region36: #{linear_attention.3} parent=31 // pred_fallthru
          _
      $region32: #{linear_attention.3} parent=5 // pred_fallthru
        _
      %p575 = scmp.le.s32.totalorder 2, %s12
      // Predicated region
      $region37: #{linear_attention.3} parent=5 // pred_check
        %p576 = pneg %p575
      $region38: #{linear_attention.3} parent=5 // pred_check_branch
        %578 = sbr.rel (%p576) target = $region40
      $region39: #{linear_attention.3} parent=5 // pred_region
        %s579 = ssub.s32 %s12, 2
        // Predicated region
        $region41: #{linear_attention.3} parent=39 // pred_check
          %p580 = pneg %p135
        $region42: #{linear_attention.3} parent=39 // pred_check_branch
          %582 = sbr.rel (%p580) target = $region44
        $region43: #{linear_attention.3} parent=39 // pred_region
          %s583 = sand.u32 %s120, 1
          %s584 = scalar_lea.sflag [#allocation3], %s583
          %s585 = sand.u32 %s120, 1
          %s586 = smul.addr %s585, 64
          %s587 = scalar_lea.vmem [#allocation2], %s586
          %589 = dma.done %s584, 1024
        $region44: #{linear_attention.3} parent=39 // pred_fallthru
          _
      $region40: #{linear_attention.3} parent=5 // pred_fallthru
        _
    $region6: #{linear_attention.3} parent=1 // loop_footer
      %s16 = sadd.s32 1, %s12
    $region7: #{linear_attention.3} parent=1 // loop_footer_branch
      %11 = sbr.rel target = $region3
    $region8: #{linear_attention.3} parent=1 // loop_exit
      _
    %590 = vsyncpa [#allocation3], 1
    %s591 = scalar_lea.sflag [#allocation3], 1
    %592 = vsyncpa %s591, 1

// kernel: linear_attention.2
$region0: #{linear_attention.2}
  #allocation0 [shape = 'u32[]', space=smem, size = 0x4, offset = 0x4, fixed_abs, tag = 'smem constant byte address 0x4 - core index']
  #allocation1 [shape = 'u32[72,128]{1,0:T(1,128)}', space=vmem, size = 0x9000, scoped, tag = 'internal scratch']
  %s0 = inlined_call_operand.hbm [shape: f32[2,4,16,32], index: 0, kind: input, shape index: {}]
  %s1 = inlined_call_operand.hbm [shape: f32[2,4,16,32], index: 1, kind: input, shape index: {}]
  %s2 = inlined_call_operand.vmem [shape: f32[2,4,32,32], index: 2, kind: output, shape index: {0}]
  %s3 = inlined_call_operand.vmem [shape: f32[2,4,1,32], index: 3, kind: output, shape index: {1}]
  %4 = xla_tuple %s2, %s3
  %s5 = sld [smem:[#allocation0]]
  $region61: #{linear_attention.2} parent=0
    _
  %s7 = ssub.s32 1, %s5
  %s8 = scalar_select 0, %s7, %s5
  $region1: #{linear_attention.2} parent=0
    #allocation2 [shape = 'u8[32768]{0}', space=vmem, size = 0x8000, scoped, tag = 'input window, operand 0']
    #allocation3 [shape = 's32[2]{0}', space=sflag, size = 0x8, scoped, tag = 'scoped memory for linear_attention.2']
    #allocation4 [shape = 'u8[32768]{0}', space=vmem, size = 0x8000, scoped, tag = 'input window, operand 1']
    #allocation5 [shape = 's32[2]{0}', space=sflag, size = 0x8, scoped, tag = 'scoped memory for linear_attention.2']
    %9 = vsyncpa [#allocation3], 0
    %s10 = scalar_lea.sflag [#allocation3], 1
    %11 = vsyncpa %s10, 0
    %12 = vsyncpa [#allocation5], 0
    %s13 = scalar_lea.sflag [#allocation5], 1
    %14 = vsyncpa %s13, 0
    loop: start=0, step=1, limit=6
    $region2: #{linear_attention.2} parent=1 // loop_pre_header
      _
    $region3: #{linear_attention.2} parent=1 // loop_header
      %s16 = sphi 0, %s20
      %p17 = scmp.ge.s32.totalorder %s16, 6
      %s23 = sphi 0, %s42
      %s24 = sphi 0, %s38
      %s25 = sphi 0, %s34
      %s26 = sphi 0, %s23
      %s27 = sphi 0, %s24
      %s28 = sphi 0, %s25
      %s29 = sphi 0, %s26
      %s30 = sphi 0, %s27
      %s31 = sphi 0, %s28
      %s49 = sphi 0, %s51
      %s52 = sphi 0, %s49
      %s53 = sphi 0, %s52
      %s69 = sphi 0, %s53
      %s79 = sphi 0, %s81
      %s82 = sphi 0, %s79
      %s83 = sphi 0, %s82
      %s99 = sphi 0, %s83
      %s107 = sphi 0, %s109
      %s110 = sphi 0, %s107
      %s111 = sphi 0, %s110
      %s127 = sphi 0, %s111
      %s135 = sphi 0, %s137
      %s138 = sphi 0, %s135
      %s139 = sphi 0, %s138
      %s155 = sphi 0, %s139
    $region4: #{linear_attention.2} parent=1 // loop_header_branch
      %19 = sbr.rel (%p17) target = $region8
    $region5: #{linear_attention.2} parent=1 // loop_body
      %s21 = ssub.s32 %s16, 1
      %s22 = ssub.s32 %s16, 2
      %s32 = sadd.s32 1, %s25
      %p33 = scmp.ge.s32.totalorder %s32, 1
      %s34 = scalar_select %p33, 0, %s32
      %s35 = sadd.s32 1, %s24
      %s36 = scalar_select %p33, %s35, %s24
      %p37 = scmp.ge.s32.totalorder %s36, 2
      %s38 = scalar_select %p37, 0, %s36
      %s39 = sadd.s32 1, %s23
      %s40 = scalar_select %p37, %s39, %s23
      %p41 = scmp.ge.s32.totalorder %s40, 2
      %s42 = scalar_select %p41, 0, %s40
      %s43 = ssub.s32 %s23, %s42
      %s44 = ssub.s32 %s24, %s38
      %s45 = sor.u32 %s43, %s44
      %s46 = ssub.s32 %s25, %s34
      %s47 = sor.u32 %s45, %s46
      %p48 = scmp.eq.s32.totalorder %s47, 0
      %s50 = sadd.s32 %s49, 1
      %s51 = scalar_select %p48, %s49, %s50
      %p54 = pneg %p48
      %p55 = scmp.eq.s32.totalorder %s16, 3
      %p56 = por %p54, %p55
      %p57 = scmp.ne.s32.totalorder %s49, %s52
      %p58 = scmp.eq.s32.totalorder %s16, 0
      %p59 = por %p57, %p58
      %p60 = scmp.ne.s32.totalorder %s49, %s52
      %p61 = scmp.eq.s32.totalorder %s21, 3
      %p62 = por %p60, %p61
      %p63 = scmp.ne.s32.totalorder %s52, %s53
      %p64 = scmp.eq.s32.totalorder %s21, 0
      %p65 = por %p63, %p64
      %p66 = scmp.ne.s32.totalorder %s52, %s53
      %p67 = scmp.eq.s32.totalorder %s22, 3
      %p68 = por %p66, %p67
      %p70 = scmp.ne.s32.totalorder %s53, %s69
      %p71 = scmp.eq.s32.totalorder %s22, 0
      %p72 = por %p70, %p71
      %s73 = ssub.s32 %s23, %s42
      %s74 = ssub.s32 %s24, %s38
      %s75 = sor.u32 %s73, %s74
      %s76 = ssub.s32 %s25, %s34
      %s77 = sor.u32 %s75, %s76
      %p78 = scmp.eq.s32.totalorder %s77, 0
      %s80 = sadd.s32 %s79, 1
      %s81 = scalar_select %p78, %s79, %s80
      %p84 = pneg %p78
      %p85 = scmp.eq.s32.totalorder %s16, 3
      %p86 = por %p84, %p85
      %p87 = scmp.ne.s32.totalorder %s79, %s82
      %p88 = scmp.eq.s32.totalorder %s16, 0
      %p89 = por %p87, %p88
      %p90 = scmp.ne.s32.totalorder %s79, %s82
      %p91 = scmp.eq.s32.totalorder %s21, 3
      %p92 = por %p90, %p91
      %p93 = scmp.ne.s32.totalorder %s82, %s83
      %p94 = scmp.eq.s32.totalorder %s21, 0
      %p95 = por %p93, %p94
      %p96 = scmp.ne.s32.totalorder %s82, %s83
      %p97 = scmp.eq.s32.totalorder %s22, 3
      %p98 = por %p96, %p97
      %p100 = scmp.ne.s32.totalorder %s83, %s99
      %p101 = scmp.eq.s32.totalorder %s22, 0
      %p102 = por %p100, %p101
      %s103 = ssub.s32 %s23, %s42
      %s104 = ssub.s32 %s24, %s38
      %s105 = sor.u32 %s103, %s104
      %p106 = scmp.eq.s32.totalorder %s105, 0
      %s108 = sadd.s32 %s107, 1
      %s109 = scalar_select %p106, %s107, %s108
      %p112 = pneg %p106
      %p113 = scmp.eq.s32.totalorder %s16, 3
      %p114 = por %p112, %p113
      %p115 = scmp.ne.s32.totalorder %s107, %s110
      %p116 = scmp.eq.s32.totalorder %s16, 0
      %p117 = por %p115, %p116
      %p118 = scmp.ne.s32.totalorder %s107, %s110
      %p119 = scmp.eq.s32.totalorder %s21, 3
      %p120 = por %p118, %p119
      %p121 = scmp.ne.s32.totalorder %s110, %s111
      %p122 = scmp.eq.s32.totalorder %s21, 0
      %p123 = por %p121, %p122
      %p124 = scmp.ne.s32.totalorder %s110, %s111
      %p125 = scmp.eq.s32.totalorder %s22, 3
      %p126 = por %p124, %p125
      %p128 = scmp.ne.s32.totalorder %s111, %s127
      %p129 = scmp.eq.s32.totalorder %s22, 0
      %p130 = por %p128, %p129
      %s131 = ssub.s32 %s23, %s42
      %s132 = ssub.s32 %s24, %s38
      %s133 = sor.u32 %s131, %s132
      %p134 = scmp.eq.s32.totalorder %s133, 0
      %s136 = sadd.s32 %s135, 1
      %s137 = scalar_select %p134, %s135, %s136
      %p140 = pneg %p134
      %p141 = scmp.eq.s32.totalorder %s16, 3
      %p142 = por %p140, %p141
      %p143 = scmp.ne.s32.totalorder %s135, %s138
      %p144 = scmp.eq.s32.totalorder %s16, 0
      %p145 = por %p143, %p144
      %p146 = scmp.ne.s32.totalorder %s135, %s138
      %p147 = scmp.eq.s32.totalorder %s21, 3
      %p148 = por %p146, %p147
      %p149 = scmp.ne.s32.totalorder %s138, %s139
      %p150 = scmp.eq.s32.totalorder %s21, 0
      %p151 = por %p149, %p150
      %p152 = scmp.ne.s32.totalorder %s138, %s139
      %p153 = scmp.eq.s32.totalorder %s22, 3
      %p154 = por %p152, %p153
      %p156 = scmp.ne.s32.totalorder %s139, %s155
      %p157 = scmp.eq.s32.totalorder %s22, 0
      %p158 = por %p156, %p157
      %p159 = scmp.le.s32.totalorder 1, %s16
      %p160 = scmp.lt.s32.totalorder %s16, 5
      %p161 = pnand %p159, %p160
      %p162 = pneg %p161
      // Predicated region
      $region9: #{linear_attention.2} parent=5 // pred_check
        _
      $region10: #{linear_attention.2} parent=5 // pred_check_branch
        %164 = sbr.rel (%p161) target = $region12
      $region11: #{linear_attention.2} parent=5 // pred_region
        %s165 = ssub.s32 %s16, 1
      $region12: #{linear_attention.2} parent=5 // pred_fallthru
        _
      %p166 = scmp.lt.s32.totalorder %s16, 4
      // Predicated region
      $region13: #{linear_attention.2} parent=5 // pred_check
        %p167 = pneg %p166
      $region14: #{linear_attention.2} parent=5 // pred_check_branch
        %169 = sbr.rel (%p167) target = $region16
      $region15: #{linear_attention.2} parent=5 // pred_region
        // Predicated region
        $region17: #{linear_attention.2} parent=15 // pred_check
          %p170 = pneg %p59
        $region18: #{linear_attention.2} parent=15 // pred_check_branch
          %172 = sbr.rel (%p170) target = $region20
        $region19: #{linear_attention.2} parent=15 // pred_region
          %s173 = sand.u32 %s49, 1
          %s174 = scalar_lea.sflag [#allocation3], %s173
          %s175 = sand.u32 %s49, 1
          %s176 = smul.addr %s175, 32
          %s177 = scalar_lea.vmem [#allocation2], %s176
          %s178 = smul.u32 2, %s24
          %s179 = smul.u32 2, %s25
          %181 = vsyncadd %s174, 0
          %s182 = smul.addr %s178, 2
          %s183 = sadd.s32 %s179, %s182
          %s184 = smul.addr %s23, 8
          %s185 = sadd.s32 %s183, %s184
          %s186 = smul.addr %s185, 8
          %s187 = scalar_lea.hbm %s0, %s186
          %s188 = sshll.u32 %s187, 4
          %s189 = int_to_ptr.hbm [resolvable:$true] %s188
          %s190 = sshll.u32 %s177, 4
          %s191 = int_to_ptr.vmem [resolvable:$true] %s190
          %196 = dma.hbm_to_vmem [thread:$0]  %s189, 512, %s191, %s174, 128, 128, 8
        $region20: #{linear_attention.2} parent=15 // pred_fallthru
          _
        // Predicated region
        $region21: #{linear_attention.2} parent=15 // pred_check
          %p197 = pneg %p89
        $region22: #{linear_attention.2} parent=15 // pred_check_branch
          %199 = sbr.rel (%p197) target = $region24
        $region23: #{linear_attention.2} parent=15 // pred_region
          %s200 = sand.u32 %s79, 1
          %s201 = scalar_lea.sflag [#allocation5], %s200
          %s202 = sand.u32 %s79, 1
          %s203 = smul.addr %s202, 32
          %s204 = scalar_lea.vmem [#allocation4], %s203
          %s205 = smul.u32 2, %s24
          %s206 = smul.u32 2, %s25
          %208 = vsyncadd %s201, 0
          %s209 = smul.addr %s205, 2
          %s210 = sadd.s32 %s206, %s209
          %s211 = smul.addr %s23, 8
          %s212 = sadd.s32 %s210, %s211
          %s213 = smul.addr %s212, 8
          %s214 = scalar_lea.hbm %s1, %s213
          %s215 = sshll.u32 %s214, 4
          %s216 = int_to_ptr.hbm [resolvable:$true] %s215
          %s217 = sshll.u32 %s204, 4
          %s218 = int_to_ptr.vmem [resolvable:$true] %s217
          %223 = dma.hbm_to_vmem [thread:$0]  %s216, 512, %s218, %s201, 128, 128, 8
        $region24: #{linear_attention.2} parent=15 // pred_fallthru
          _
      $region16: #{linear_attention.2} parent=5 // pred_fallthru
        _
      %p224 = scmp.le.s32.totalorder 1, %s16
      %p225 = scmp.lt.s32.totalorder %s16, 5
      %p226 = pnand %p224, %p225
      %p227 = pneg %p226
      // Predicated region
      $region25: #{linear_attention.2} parent=5 // pred_check
        _
      $region26: #{linear_attention.2} parent=5 // pred_check_branch
        %229 = sbr.rel (%p226) target = $region28
      $region27: #{linear_attention.2} parent=5 // pred_region
        %s230 = ssub.s32 %s16, 1
        %s231 = sand.u32 %s52, 1
        %s232 = scalar_lea.sflag [#allocation3], %s231
        %s233 = sand.u32 %s52, 1
        %s234 = smul.addr %s233, 32
        %s235 = scalar_lea.vmem [#allocation2], %s234
        // Predicated region
        $region29: #{linear_attention.2} parent=27 // pred_check
          %p236 = pneg %p65
        $region30: #{linear_attention.2} parent=27 // pred_check_branch
          %238 = sbr.rel (%p236) target = $region32
        $region31: #{linear_attention.2} parent=27 // pred_region
          %240 = dma.done %s232, 512
        $region32: #{linear_attention.2} parent=27 // pred_fallthru
          _
        %s241 = sand.u32 %s82, 1
        %s242 = scalar_lea.sflag [#allocation5], %s241
        %s243 = sand.u32 %s82, 1
        %s244 = smul.addr %s243, 32
        %s245 = scalar_lea.vmem [#allocation4], %s244
        // Predicated region
        $region33: #{linear_attention.2} parent=27 // pred_check
          %p246 = pneg %p95
        $region34: #{linear_attention.2} parent=27 // pred_check_branch
          %248 = sbr.rel (%p246) target = $region36
        $region35: #{linear_attention.2} parent=27 // pred_region
          %250 = dma.done %s242, 512
        $region36: #{linear_attention.2} parent=27 // pred_fallthru
          _
        %s251 = sand.u32 %s52, 1
        %s252 = scalar_lea.sflag [#allocation3], %s251
        %s253 = sand.u32 %s52, 1
        %s254 = smul.addr %s253, 32
        %s255 = scalar_lea.vmem [#allocation2], %s254
        %p256 = pneg %p65
        %p257 = pneg %p62
        %s258 = sand.u32 %s82, 1
        %s259 = scalar_lea.sflag [#allocation5], %s258
        %s260 = sand.u32 %s82, 1
        %s261 = smul.addr %s260, 32
        %s262 = scalar_lea.vmem [#allocation4], %s261
        %p263 = pneg %p95
        %p264 = pneg %p92
        %p265 = pneg %p123
        %p266 = pneg %p120
        %s267 = smul.u32 2, %s27
        %p268 = scmp.lt.s32.totalorder %s26, 1
        %s269 = scalar_select %p268, %s26, 1
        %p270 = scmp.lt.s32.totalorder %s267, 3
        %s271 = scalar_select %p270, %s267, 3
        %s272 = smul.addr %s271, 4
        %s273 = smul.addr %s269, 16
        %s274 = sadd.s32 %s272, %s273
        %s275 = smul.addr %s274, 8
        %s276 = scalar_lea.vmem %s2, %s275
        %p277 = pneg %p151
        %p278 = pneg %p148
        %s279 = smul.u32 2, %s27
        %p280 = scmp.lt.s32.totalorder %s26, 1
        %s281 = scalar_select %p280, %s26, 1
        %p282 = scmp.lt.s32.totalorder %s279, 3
        %s283 = scalar_select %p282, %s279, 3
        %s284 = smul.addr %s281, 4
        %s285 = sadd.s32 %s283, %s284
        %s286 = scalar_lea.vmem %s3, %s285
        %s287 = smul.u32 2, %s27
        %s288 = smul.u32 2, %s28
        %s289 = smul.u32 2, %s27
        %s290 = smul.u32 2, %s28
        %s291 = smul.u32 2, %s27
        %p292 = scmp.lt.s32.totalorder %s26, 1
        %s293 = scalar_select %p292, %s26, 1
        %p294 = scmp.lt.s32.totalorder %s291, 3
        %s295 = scalar_select %p294, %s291, 3
        %s296 = smul.addr %s295, 4
        %s297 = smul.addr %s293, 16
        %s298 = sadd.s32 %s296, %s297
        %s299 = smul.addr %s298, 8
        %s300 = scalar_lea.vmem %s2, %s299
        %s301 = smul.u32 2, %s27
        %s302 = smul.u32 2, %s27
        %p303 = scmp.lt.s32.totalorder %s26, 1
        %s304 = scalar_select %p303, %s26, 1
        %p305 = scmp.lt.s32.totalorder %s302, 3
        %s306 = scalar_select %p305, %s302, 3
        %s307 = smul.addr %s304, 4
        %s308 = sadd.s32 %s306, %s307
        %s309 = scalar_lea.vmem %s3, %s308
        %s310 = smul.u32 2, %s27
        %p312 = scmp.eq.s32.totalorder %s28, 0
        // Predicated region
        $region37: #{linear_attention.2} parent=27 // pred_check
          %p313 = pneg %p312
        $region38: #{linear_attention.2} parent=27 // pred_check_branch
          %315 = sbr.rel (%p313) target = $region40
        $region39: #{linear_attention.2} parent=27 // pred_region
          %vm316 = vcmask 261120
          %317 = vst.msk [vmem:[%s300] sm:$0xff] %vm316, 0.0
          %318 = vst.msk [vmem:[%s300 + $0x8] sm:$0xff] %vm316, 0.0
          %319 = vst.msk [vmem:[%s300 + $0x10] sm:$0xff] %vm316, 0.0
          %320 = vst.msk [vmem:[%s300 + $0x18] sm:$0xff] %vm316, 0.0
          %321 = vst.msk [vmem:[%s300 + $0x20] sm:$0xff] %vm316, 0.0
          %322 = vst.msk [vmem:[%s300 + $0x28] sm:$0xff] %vm316, 0.0
          %323 = vst.msk [vmem:[%s300 + $0x30] sm:$0xff] %vm316, 0.0
          %324 = vst.msk [vmem:[%s300 + $0x38] sm:$0xff] %vm316, 0.0
          %vm325 = vcmask 253952
          %326 = vst.msk [vmem:[%s309] sm:$0x1] %vm325, 0.0
          %327 = vst.msk [vmem:[%s309 + $0x1] sm:$0x1] %vm325, 0.0
        $region40: #{linear_attention.2} parent=27 // pred_fallthru
          _
        %v328 = vld [vmem:[%s235] sm:$0xff]
        %v329 = vld [vmem:[%s235 + $0x8] sm:$0xff]
        %v330 = vld [vmem:[%s235 + $0x10] sm:$0xff]
        %v331 = vld [vmem:[%s235 + $0x18] sm:$0xff]
        %vm332 = vcmp.gt.f32.partialorder %v328, 0.0
        %vm333 = vcmp.gt.f32.partialorder %v329, 0.0
        %vm334 = vcmp.gt.f32.partialorder %v330, 0.0
        %vm335 = vcmp.gt.f32.partialorder %v331, 0.0
        %v336 = vadd.f32 %v328, 1.0
        %v337 = vadd.f32 %v329, 1.0
        %v338 = vadd.f32 %v330, 1.0
        %v339 = vadd.f32 %v331, 1.0
        %v340 = vmin.f32 %v328, 0.0
        %v341 = vmin.f32 %v329, 0.0
        %v342 = vmin.f32 %v330, 0.0
        %v343 = vmin.f32 %v331, 0.0
        %v344 = vmul.f32 %v340, 1.442695
        %v345 = vpow.pop %v344
        %v346 = vmul.f32 %v341, 1.442695
        %v347 = vpow.pop %v346
        %v348 = vmul.f32 %v342, 1.442695
        %v349 = vpow.pop %v348
        %v350 = vmul.f32 %v343, 1.442695
        %v351 = vpow.pop %v350
        %v352 = vsel %vm332, %v336, %v345
        %v353 = vsel %vm333, %v337, %v347
        %v354 = vsel %vm334, %v338, %v349
        %v355 = vsel %vm335, %v339, %v351
        %v356 = vld [vmem:[%s245] sm:$0xff]
        %v357 = vld [vmem:[%s245 + $0x8] sm:$0xff]
        %v358 = vld [vmem:[%s245 + $0x10] sm:$0xff]
        %v359 = vld [vmem:[%s245 + $0x18] sm:$0xff]
        %v360 = vld [vmem:[%s300] sm:$0xff]
        %v361 = vld [vmem:[%s300 + $0x8] sm:$0xff]
        %v362 = vld [vmem:[%s300 + $0x10] sm:$0xff]
        %v363 = vld [vmem:[%s300 + $0x18] sm:$0xff]
        %v364 = vld [vmem:[%s300 + $0x20] sm:$0xff]
        %v365 = vld [vmem:[%s300 + $0x28] sm:$0xff]
        %v366 = vld [vmem:[%s300 + $0x30] sm:$0xff]
        %v367 = vld [vmem:[%s300 + $0x38] sm:$0xff]
        %v368 = vpack.c.bf16 %v352, %v352
        %v369 = vpack.c.bf16 %v353, %v353
        %v370 = vpack.c.bf16 %v354, %v354
        %v371 = vpack.c.bf16 %v355, %v355
        %v372 = vpack.c.bf16 %v356, %v356
        %v373 = vpack.c.bf16 %v357, %v357
        %v374 = vpack.c.bf16 %v358, %v358
        %v375 = vpack.c.bf16 %v359, %v359
        %v378 = vunpack.c.l.b16 %v368
        %v379 = vunpack.c.l.b16 %v369
        %v380 = vpack.c.b16 %v379, %v378
        %382 = vxpose.xlu0.c.b16.start [1/8] %v380, 128
        %383 = vxpose.xlu0.c.b16.cont [2/8] 0, 128
        %384 = vxpose.xlu0.c.b16.cont [3/8] 0, 128
        %385 = vxpose.xlu0.c.b16.cont [4/8] 0, 128
        %386 = vxpose.xlu0.c.b16.cont [5/8] 0, 128
        %387 = vxpose.xlu0.c.b16.cont [6/8] 0, 128
        %388 = vxpose.xlu0.c.b16.cont [7/8] 0, 128
        %389 = vxpose.xlu0.c.b16.end [8/8] 0, 128
        %v390 = vpop.trf.xlu0
        %v391 = vpop.trf.xlu0
        %v392 = vpop.trf.xlu0
        %v393 = vpop.trf.xlu0
        %v394 = vpop.trf.xlu0
        %v395 = vpop.trf.xlu0
        %v396 = vpop.trf.xlu0
        %v397 = vpop.trf.xlu0
        %v400 = vunpack.c.l.b16 %v372
        %v401 = vunpack.c.l.b16 %v373
        %v402 = vpack.c.b16 %v401, %v400
        %vm404 = vcmask 130048
        %v406 = vsel %vm404, %v390, 0
        %v409 = vsel %vm404, %v391, 0
        %411 = vmatpush.bf16.msra.mxu0 0
        %412 = vmatpush.bf16.msra.mxu0 0
        %413 = vmatpush.bf16.msra.mxu0 0
        %414 = vmatpush.bf16.msra.mxu0 0
        %415 = vmatpush.bf16.msra.mxu0 0
        %416 = vmatpush.bf16.msra.mxu0 0
        %417 = vmatpush.bf16.msra.mxu0 0
        %418 = vmatpush.bf16.msra.mxu0 %v402
        %419 = vmatmul.bf16.gmra.mxu0 %v406
        %v420 = vpop.f32.mrf.mxu0
        %v421 = vadd.f32 0.0, %v420
        %v422 = vpop.f32.mrf.mxu0
        %v423 = vadd.f32 0.0, %v422
        %424 = vmatmul.bf16.gmra.mxu0 %v409
        %v425 = vpop.f32.mrf.mxu0
        %v426 = vadd.f32 0.0, %v425
        %v427 = vpop.f32.mrf.mxu0
        %v428 = vadd.f32 0.0, %v427
        %429 = vdwg.mxu0
        %v432 = vunpack.c.l.b16 %v370
        %v433 = vunpack.c.l.b16 %v371
        %v434 = vpack.c.b16 %v433, %v432
        %436 = vxpose.xlu0.c.b16.start [1/8] %v434, 128
        %437 = vxpose.xlu0.c.b16.cont [2/8] 0, 128
        %438 = vxpose.xlu0.c.b16.cont [3/8] 0, 128
        %439 = vxpose.xlu0.c.b16.cont [4/8] 0, 128
        %440 = vxpose.xlu0.c.b16.cont [5/8] 0, 128
        %441 = vxpose.xlu0.c.b16.cont [6/8] 0, 128
        %442 = vxpose.xlu0.c.b16.cont [7/8] 0, 128
        %443 = vxpose.xlu0.c.b16.end [8/8] 0, 128
        %v444 = vpop.trf.xlu0
        %v445 = vpop.trf.xlu0
        %v446 = vpop.trf.xlu0
        %v447 = vpop.trf.xlu0
        %v448 = vpop.trf.xlu0
        %v449 = vpop.trf.xlu0
        %v450 = vpop.trf.xlu0
        %v451 = vpop.trf.xlu0
        %v454 = vunpack.c.l.b16 %v374
        %v455 = vunpack.c.l.b16 %v375
        %v456 = vpack.c.b16 %v455, %v454
        %v459 = vsel %vm404, %v444, 0
        %v462 = vsel %vm404, %v445, 0
        %464 = vmatpush.bf16.msra.mxu0 0
        %465 = vmatpush.bf16.msra.mxu0 0
        %466 = vmatpush.bf16.msra.mxu0 0
        %467 = vmatpush.bf16.msra.mxu0 0
        %468 = vmatpush.bf16.msra.mxu0 0
        %469 = vmatpush.bf16.msra.mxu0 0
        %470 = vmatpush.bf16.msra.mxu0 0
        %471 = vmatpush.bf16.msra.mxu0 %v456
        %472 = vmatmul.bf16.gmra.mxu0 %v459
        %v473 = vpop.f32.mrf.mxu0
        %v474 = vadd.f32 0.0, %v473
        %v475 = vpop.f32.mrf.mxu0
        %v476 = vadd.f32 0.0, %v475
        %477 = vmatmul.bf16.gmra.mxu0 %v462
        %v478 = vpop.f32.mrf.mxu0
        %v479 = vadd.f32 0.0, %v478
        %v480 = vpop.f32.mrf.mxu0
        %v481 = vadd.f32 0.0, %v480
        %482 = vdwg.mxu0
        %v483 = vadd.f32 %v360, %v421
        %v484 = vadd.f32 %v361, %v423
        %v485 = vadd.f32 %v362, %v426
        %v486 = vadd.f32 %v363, %v428
        %v487 = vadd.f32 %v364, %v474
        %v488 = vadd.f32 %v365, %v476
        %v489 = vadd.f32 %v366, %v479
        %v490 = vadd.f32 %v367, %v481
        %vm491 = vcmask 261120
        %492 = vst.msk [vmem:[%s300] sm:$0xff] %vm491, %v483
        %493 = vst.msk [vmem:[%s300 + $0x8] sm:$0xff] %vm491, %v484
        %494 = vst.msk [vmem:[%s300 + $0x10] sm:$0xff] %vm491, %v485
        %495 = vst.msk [vmem:[%s300 + $0x18] sm:$0xff] %vm491, %v486
        %496 = vst.msk [vmem:[%s300 + $0x20] sm:$0xff] %vm491, %v487
        %497 = vst.msk [vmem:[%s300 + $0x28] sm:$0xff] %vm491, %v488
        %498 = vst.msk [vmem:[%s300 + $0x30] sm:$0xff] %vm491, %v489
        %499 = vst.msk [vmem:[%s300 + $0x38] sm:$0xff] %vm491, %v490
        %v500 = vld [vmem:[%s309] sm:$0x1]
        %v501 = vld [vmem:[%s309 + $0x1] sm:$0x1]
        %v502 = vsel %vm491, %v352, 0.0
        %v503 = vsel %vm491, %v353, 0.0
        %v504 = vadd.f32 %v502, %v503
        %v505 = vrot.slane %v504, 4
        %v506 = vadd.f32 %v504, %v505
        %v507 = vrot.slane %v506, 2
        %v508 = vadd.f32 %v506, %v507
        %v509 = vrot.slane %v508, 1
        %v510 = vadd.f32 %v508, %v509
        %v511 = vsel %vm491, %v354, 0.0
        %v512 = vsel %vm491, %v355, 0.0
        %v513 = vadd.f32 %v511, %v512
        %v514 = vrot.slane %v513, 4
        %v515 = vadd.f32 %v513, %v514
        %v516 = vrot.slane %v515, 2
        %v517 = vadd.f32 %v515, %v516
        %v518 = vrot.slane %v517, 1
        %v519 = vadd.f32 %v517, %v518
        %v520 = vadd.f32 %v500, %v510
        %v521 = vadd.f32 %v501, %v519
        %vm522 = vcmask 253952
        %523 = vst.msk [vmem:[%s309] sm:$0x1] %vm522, %v520
        %524 = vst.msk [vmem:[%s309 + $0x1] sm:$0x1] %vm522, %v521
        %s525 = smul.u32 2, %s27
        %p526 = scmp.lt.s32.totalorder %s26, 1
        %s527 = scalar_select %p526, %s26, 1
        %p528 = scmp.lt.s32.totalorder %s525, 3
        %s529 = scalar_select %p528, %s525, 3
        %s530 = smul.addr %s529, 4
        %s531 = smul.addr %s527, 16
        %s532 = sadd.s32 %s530, %s531
        %s533 = smul.addr %s532, 8
        %s534 = scalar_lea.vmem %s2, %s533
        %s535 = smul.u32 2, %s27
        %p536 = scmp.lt.s32.totalorder %s26, 1
        %s537 = scalar_select %p536, %s26, 1
        %p538 = scmp.lt.s32.totalorder %s535, 3
        %s539 = scalar_select %p538, %s535, 3
        %s540 = smul.addr %s537, 4
        %s541 = sadd.s32 %s539, %s540
        %s542 = scalar_lea.vmem %s3, %s541
        // Predicated region
        $region41: #{linear_attention.2} parent=27 // pred_check
          %p543 = pneg %p120
        $region42: #{linear_attention.2} parent=27 // pred_check_branch
          %545 = sbr.rel (%p543) target = $region44
        $region43: #{linear_attention.2} parent=27 // pred_region
          %s546 = smul.u32 2, %s27
        $region44: #{linear_attention.2} parent=27 // pred_fallthru
          _
        // Predicated region
        $region45: #{linear_attention.2} parent=27 // pred_check
          %p547 = pneg %p148
        $region46: #{linear_attention.2} parent=27 // pred_check_branch
          %549 = sbr.rel (%p547) target = $region48
        $region47: #{linear_attention.2} parent=27 // pred_region
          %s550 = smul.u32 2, %s27
        $region48: #{linear_attention.2} parent=27 // pred_fallthru
          _
      $region28: #{linear_attention.2} parent=5 // pred_fallthru
        _
      %p551 = scmp.le.s32.totalorder 2, %s16
      // Predicated region
      $region49: #{linear_attention.2} parent=5 // pred_check
        %p552 = pneg %p551
      $region50: #{linear_attention.2} parent=5 // pred_check_branch
        %554 = sbr.rel (%p552) target = $region52
      $region51: #{linear_attention.2} parent=5 // pred_region
        %s555 = ssub.s32 %s16, 2
        // Predicated region
        $region53: #{linear_attention.2} parent=51 // pred_check
          %p556 = pneg %p126
        $region54: #{linear_attention.2} parent=51 // pred_check_branch
          %558 = sbr.rel (%p556) target = $region56
        $region55: #{linear_attention.2} parent=51 // pred_region
          %s559 = smul.u32 2, %s30
          %p560 = scmp.lt.s32.totalorder %s29, 1
          %s561 = scalar_select %p560, %s29, 1
          %p562 = scmp.lt.s32.totalorder %s559, 3
          %s563 = scalar_select %p562, %s559, 3
          %s564 = smul.addr %s563, 4
          %s565 = smul.addr %s561, 16
          %s566 = sadd.s32 %s564, %s565
          %s567 = smul.addr %s566, 8
          %s568 = scalar_lea.vmem %s2, %s567
        $region56: #{linear_attention.2} parent=51 // pred_fallthru
          _
        // Predicated region
        $region57: #{linear_attention.2} parent=51 // pred_check
          %p569 = pneg %p154
        $region58: #{linear_attention.2} parent=51 // pred_check_branch
          %571 = sbr.rel (%p569) target = $region60
        $region59: #{linear_attention.2} parent=51 // pred_region
          %s572 = smul.u32 2, %s30
          %p573 = scmp.lt.s32.totalorder %s29, 1
          %s574 = scalar_select %p573, %s29, 1
          %p575 = scmp.lt.s32.totalorder %s572, 3
          %s576 = scalar_select %p575, %s572, 3
          %s577 = smul.addr %s574, 4
          %s578 = sadd.s32 %s576, %s577
          %s579 = scalar_lea.vmem %s3, %s578
        $region60: #{linear_attention.2} parent=51 // pred_fallthru
          _
      $region52: #{linear_attention.2} parent=5 // pred_fallthru
        _
    $region6: #{linear_attention.2} parent=1 // loop_footer
      %s20 = sadd.s32 1, %s16
    $region7: #{linear_attention.2} parent=1 // loop_footer_branch
      %15 = sbr.rel target = $region3
    $region8: #{linear_attention.2} parent=1 // loop_exit
      _
    %580 = vsyncpa [#allocation3], 1
    %s581 = scalar_lea.sflag [#allocation3], 1
    %582 = vsyncpa %s581, 1
    %583 = vsyncpa [#allocation5], 1
    %s584 = scalar_lea.sflag [#allocation5], 1
    %585 = vsyncpa %s584, 1

</llo_original>
